<compile_context>
chip_gen: v7x
topology: tpu7x:2x2x1
jax: 0.10.0
libtpu: 0.0.40
codegen_flags: <defaults>
</compile_context>

<pallas_src>
import functools

import jax
import jax.numpy as jnp
from jax.experimental import pallas as pl
from jax.experimental.pallas import tpu as pltpu


# ---------------------------------------------------------------------------
# Kernel 1: 1x1 conv (channels-first matmul), tiled over (image, pixel-tile).
# ---------------------------------------------------------------------------
def _conv1x1_kernel(x_ref, w_ref, y_ref):
    # x_ref: (1, Cin_p, tile_p) bf16   one pixel tile of one image, channels-first
    # w_ref: (C, Cin_p)         bf16   1x1 conv weight
    # y_ref: (1, C, tile_p)     bf16   conv output tile
    y = jnp.dot(w_ref[...], x_ref[0], preferred_element_type=jnp.float32)
    y_ref[0] = y.astype(y_ref.dtype)


# ---------------------------------------------------------------------------
# Kernel 2: separable bilinear upsample + (log_)softmax over classes,
#           tiled over (image, output-row-tile).  No cross-iteration carry.
# ---------------------------------------------------------------------------
def _upsample_softmax_kernel(y_ref, wh_ref, ww_ref, o_ref, *, use_softmax):
    # y_ref : (1, C, Hi, Wi)       bf16  conv output for one image
    # wh_ref: (tile_h, Hi)         f32   rows of the H interpolation matrix for this tile
    # ww_ref: (Wo, Wi)             f32   W interpolation matrix
    # o_ref : (1, C, tile_h, Wo)   bf16  NCHW output tile (lane-dense Wo)
    c, hi, wi = y_ref.shape[1:]
    t_ho = wh_ref.shape[0]
    wo = ww_ref.shape[0]

    y = y_ref[0]                                    # (C, Hi, Wi) bf16
    wh = wh_ref[...].astype(jnp.bfloat16)           # bf16 MXU operands, f32 accumulation
    ww = ww_ref[...].astype(jnp.bfloat16)

    # H-upsample, batched over classes.
    # TODO(synk): replace broadcast + batched small matmul with a 2-tap lerp over the
    # contiguous band of input rows (Wh has exactly 2 nonzeros per row).
    wh_b = jnp.broadcast_to(wh[None, :, :], (c, t_ho, hi))
    z = jax.lax.dot_general(
        wh_b, y,
        dimension_numbers=(((2,), (1,)), ((0,), (0,))),
        preferred_element_type=jnp.float32)         # (C, tile_h, Wi) f32
    z = z.astype(jnp.bfloat16)

    # W-upsample as one lane-dense matmul: (C*tile_h, Wi) x (Wo, Wi)^T -> (C*tile_h, Wo).
    u = jax.lax.dot_general(
        z.reshape(c * t_ho, wi), ww,
        dimension_numbers=(((1,), (1,)), ((), ())),
        preferred_element_type=jnp.float32)
    u = u.reshape(c, t_ho, wo)                      # (C, tile_h, Wo) f32

    # softmax / log_softmax over the class axis (leading dim); kept in f32.
    # TODO(synk): on v6e/v7x the exp could run in bf16 (f32 sum) for ~2x EUP throughput.
    mx = jnp.max(u, axis=0, keepdims=True)
    e = jnp.exp(u - mx)
    s = jnp.sum(e, axis=0, keepdims=True)
    if use_softmax:
        # approx reciprocal: probabilities sum to 1 only to ~1e-3 (inference-grade).
        out = e * pl.reciprocal(s, approx=True)
    else:
        out = (u - mx) - jnp.log(s)
    o_ref[0] = out.astype(o_ref.dtype)


# ---------------------------------------------------------------------------
# Host-side helpers.
# ---------------------------------------------------------------------------
def _interp_matrix(out_size, in_size):
    """1-D bilinear interpolation matrix, PyTorch align_corners=False semantics."""
    if out_size == in_size:
        return jnp.eye(in_size, dtype=jnp.float32)
    scale = in_size / out_size
    dst = jnp.arange(out_size, dtype=jnp.float32)
    src = jnp.maximum((dst + 0.5) * scale - 0.5, 0.0)
    i0 = jnp.minimum(jnp.floor(src).astype(jnp.int32), in_size - 1)
    i1 = jnp.minimum(i0 + 1, in_size - 1)
    lam1 = src - i0.astype(jnp.float32)
    lam0 = 1.0 - lam1
    rows = jnp.arange(out_size)
    m = jnp.zeros((out_size, in_size), jnp.float32)
    m = m.at[rows, i0].add(lam0)
    m = m.at[rows, i1].add(lam1)
    return m


def _tpu_vmem_capacity_bytes():
    """Physical VMEM per core; conservative (v7x-sized) fallback if the query fails."""
    try:
        cap = getattr(pltpu.get_tpu_info(), "vmem_capacity_bytes", None)
        if cap:
            return int(cap)
    except Exception:
        pass
    return 64 * 1024 * 1024


def _vmem_plan():
    cap = _tpu_vmem_capacity_bytes()
    # Leave headroom for compiler-internal scratch: v7x (64 MiB) -> 48 MiB limit,
    # v5e/v6e (128 MiB) -> 112 MiB limit.
    limit = int(min(max(cap - (16 << 20), 32 << 20), 112 << 20))
    budget = (3 * limit) // 4      # what the tile pickers plan against
    return limit, budget


def _largest_tile(extent, step, cap):
    """Largest multiple of `step` <= min(extent, cap) that divides `extent` (or None)."""
    best, t = None, step
    while t <= min(extent, cap):
        if extent % t == 0:
            best = t
        t += step
    return best


def _pick_tile_h(h_out, num_class, w_out, h_in, w_in, vmem_budget):
    """Output-row tile for the upsample/softmax kernel, from a per-chip VMEM budget."""
    if h_out % 8 != 0:
        return h_out
    # per output row: 2 bf16 out buffers + ~2 live f32 softmax intermediates + bf16 z / wh_b
    per_row = num_class * (w_out * (2 * 2 + 2 * 4) + (h_in + w_in) * 2 + w_in * 4)
    fixed = 2 * num_class * h_in * w_in * 2 + 4 * (w_out * w_in + h_out * h_in) + (1 << 20)
    max_rows = min(128, max(8, (vmem_budget - fixed) // max(per_row, 1)))
    for step in (16, 8):           # prefer bf16-sublane-friendly multiples of 16
        t = _largest_tile(h_out, step, max(max_rows, step))
        if t is not None:
            return t
    return h_out


def _pick_tile_p(p, cin_p, num_class, vmem_budget):
    """Pixel tile for the 1x1-conv kernel."""
    if p <= 512 or p % 128 != 0:
        return p
    per_col = 2 * 2 * (cin_p + num_class)   # double-buffered bf16 x and y columns
    cap = max(128, vmem_budget // max(per_col, 1))
    t = _largest_tile(p, 128, cap)
    return t if t is not None else p


# ---------------------------------------------------------------------------
# Forward wrapper.
# ---------------------------------------------------------------------------
def c1bilinear_forward(x_nchw, conv_weight, seg_size, use_softmax=False,
                       tile_h=None, tile_p=None, out_dtype=jnp.bfloat16):
    """Forward pass of C1Bilinear.

    x_nchw:      (N, fc_dim, H, W) float32      (PyTorch NCHW convention)
    conv_weight: (num_class, fc_dim, 1, 1)      (nn.Conv2d weight, bias=False)
    seg_size:    int or (int, int) target spatial size
    returns:     (N, num_class, segH, segW) log_softmax (or softmax) over classes, `out_dtype`
    """
    if isinstance(seg_size, int):
        seg_size = (seg_size, seg_size)
    n, c_in, h_in, w_in = x_nchw.shape
    num_class = conv_weight.shape[0]
    h_out, w_out = seg_size
    p = h_in * w_in
    cin_p = ((c_in + 127) // 128) * 128       # MXU contraction depth

    vmem_limit, vmem_budget = _vmem_plan()
    if tile_h is None:
        tile_h = _pick_tile_h(h_out, num_class, w_out, h_in, w_in, vmem_budget)
    assert h_out % tile_h == 0, (h_out, tile_h)
    n_tiles = h_out // tile_h
    if tile_p is None:
        tile_p = _pick_tile_p(p, cin_p, num_class, vmem_budget)
    assert p % tile_p == 0, (p, tile_p)
    n_ptiles = p // tile_p

    # bf16 conv operands; pad the contraction dim (fc_dim) to a multiple of 128.
    x_flat = x_nchw.reshape(n, c_in, p).astype(jnp.bfloat16)
    w2d = conv_weight.reshape(num_class, c_in).astype(jnp.bfloat16)
    if cin_p != c_in:
        x_flat = jnp.pad(x_flat, ((0, 0), (0, cin_p - c_in), (0, 0)))
        w2d = jnp.pad(w2d, ((0, 0), (0, cin_p - c_in)))

    out_itemsize = jnp.dtype(out_dtype).itemsize

    # --- call 1: 1x1 conv, grid (image, pixel tile); no carry -> both axes parallel ---
    conv_cost = pl.CostEstimate(
        flops=2 * n * num_class * p * cin_p,
        transcendentals=0,
        bytes_accessed=x_flat.size * 2 + w2d.size * 2 + n * num_class * p * 2)
    y = pl.pallas_call(
        _conv1x1_kernel,
        out_shape=jax.ShapeDtypeStruct((n, num_class, p), jnp.bfloat16),
        grid_spec=pltpu.PrefetchScalarGridSpec(
            num_scalar_prefetch=0,
            grid=(n, n_ptiles),
            in_specs=[
                pl.BlockSpec((1, cin_p, tile_p), lambda b, q: (b, 0, q)),
                pl.BlockSpec((num_class, cin_p), lambda b, q: (0, 0)),
            ],
            out_specs=pl.BlockSpec((1, num_class, tile_p), lambda b, q: (b, 0, q)),
        ),
        compiler_params=pltpu.CompilerParams(
            dimension_semantics=("parallel", "parallel"),
            vmem_limit_bytes=vmem_limit),
        cost_estimate=conv_cost,
    )(x_flat, w2d)
    y = y.reshape(n, num_class, h_in, w_in)   # metadata-only reshape between the calls

    # Separable bilinear interpolation weights (f32 in HBM, cast to bf16 inside the kernel).
    wh = _interp_matrix(h_out, h_in)          # (Ho, Hi)
    ww = _interp_matrix(w_out, w_in)          # (Wo, Wi)

    # --- call 2: upsample + softmax, grid (image, output-row tile); both axes parallel ---
    up_cost = pl.CostEstimate(
        flops=2 * n * num_class * (h_out * h_in * w_in + h_out * w_out * w_in),
        transcendentals=n * h_out * w_out * (num_class + 1),
        bytes_accessed=(n * num_class * h_in * w_in * 2 + wh.size * 4 + ww.size * 4
                        + n * num_class * h_out * w_out * out_itemsize))
    kernel = functools.partial(_upsample_softmax_kernel, use_softmax=use_softmax)
    out = pl.pallas_call(
        kernel,
        out_shape=jax.ShapeDtypeStruct((n, num_class, h_out, w_out), out_dtype),
        grid_spec=pltpu.PrefetchScalarGridSpec(
            num_scalar_prefetch=0,
            grid=(n, n_tiles),
            in_specs=[
                pl.BlockSpec((1, num_class, h_in, w_in), lambda b, j: (b, 0, 0, 0)),
                pl.BlockSpec((tile_h, h_in), lambda b, j: (j, 0)),
                pl.BlockSpec((w_out, w_in), lambda b, j: (0, 0)),
            ],
            out_specs=pl.BlockSpec((1, num_class, tile_h, w_out),
                                   lambda b, j: (b, 0, j, 0)),
        ),
        compiler_params=pltpu.CompilerParams(
            dimension_semantics=("parallel", "parallel"),
            vmem_limit_bytes=vmem_limit),
        cost_estimate=up_cost,
    )(y, wh, ww)
    return out


def _reference(x_nchw, conv_weight, seg_size, use_softmax):
    """Pure-JAX f32 reference mirroring the PyTorch module."""
    n, c_in, h_in, w_in = x_nchw.shape
    num_class = conv_weight.shape[0]
    h_out, w_out = seg_size
    w2d = conv_weight.reshape(num_class, c_in)
    y = jnp.einsum('ck,nkhw->nchw', w2d, x_nchw)
    u = jnp.einsum('gh,nchw->ncgw', _interp_matrix(h_out, h_in), y)
    u = jnp.einsum('ow,ncgw->ncgo', _interp_matrix(w_out, w_in), u)
    if use_softmax:
        return jax.nn.softmax(u, axis=1)
    return jax.nn.log_softmax(u, axis=1)


if __name__ == "__main__":
    key = jax.random.PRNGKey(0)
    k_x, k_w = jax.random.split(key)

    # Small shapes consistent with the module: fc_dim -> num_class 1x1 conv, then upsample.
    N, fc_dim, H, W = 2, 32, 8, 8
    num_class, seg_size = 16, 32

    x = jax.random.normal(k_x, (N, fc_dim, H, W), dtype=jnp.float32)
    conv_w = 0.05 * jax.random.normal(k_w, (num_class, fc_dim, 1, 1), dtype=jnp.float32)

    out = c1bilinear_forward(x, conv_w, seg_size, use_softmax=False, tile_h=16)
    out = jax.block_until_ready(out)

    assert out.shape == (N, num_class, seg_size, seg_size), out.shape
    assert out.dtype == jnp.bfloat16, out.dtype

    out_f32 = out.astype(jnp.float32)

    # log_softmax sanity: exp sums to 1 over the class dim (bf16-output tolerance).
    probs_sum = jnp.sum(jnp.exp(out_f32), axis=1)
    assert bool(jnp.allclose(probs_sum, 1.0, atol=5e-2)), float(jnp.max(jnp.abs(probs_sum - 1.0)))

    # numerical parity with a pure-JAX f32 reference (loose tol: bf16 operands + bf16 output)
    ref = _reference(x, conv_w, (seg_size, seg_size), use_softmax=False)
    max_err = float(jnp.max(jnp.abs(out_f32 - ref)))
    assert max_err < 1e-1, max_err

    print("KERNEL_OK")
</pallas_src>

<mosaic_0001>
module attributes {stable_mosaic.version = 11 : i64} {
  func.func @_conv1x1_kernel(%arg0: i32, %arg1: i32, %arg2: memref<1x128x64xbf16, #tpu.memory_space<vmem>>, %arg3: memref<16x128xbf16, #tpu.memory_space<vmem>>, %arg4: memref<1x16x64xbf16, #tpu.memory_space<vmem>>) attributes {dimension_semantics = [#tpu.dimension_semantics<parallel>, #tpu.dimension_semantics<parallel>], iteration_bounds = array<i64: 2, 1>, scalar_prefetch = 0 : i64, scratch_operands = 0 : i64, tpu.core_type = #tpu.core_type<tc>, window_params = [{transform_indices = @transform_0, window_bounds = array<i64: 1, 128, 64>}, {pipeline_mode = #tpu.pipeline_mode<synchronous>, transform_indices = @transform_1, window_bounds = array<i64: 16, 128>}, {transform_indices = @transform_2, window_bounds = array<i64: 1, 16, 64>}]} {
    %c0 = arith.constant 0 : index
    %c0_0 = arith.constant 0 : index
    %0 = vector.load %arg3[%c0, %c0_0] : memref<16x128xbf16, #tpu.memory_space<vmem>>, vector<16x128xbf16>
    %c0_1 = arith.constant 0 : index
    %c0_2 = arith.constant 0 : index
    %c0_3 = arith.constant 0 : index
    %1 = vector.load %arg2[%c0_1, %c0_2, %c0_3] : memref<1x128x64xbf16, #tpu.memory_space<vmem>>, vector<1x128x64xbf16>
    %2 = vector.shape_cast %1 : vector<1x128x64xbf16> to vector<128x64xbf16>
    %cst = arith.constant dense<0.000000e+00> : vector<16x64xf32>
    %3 = tpu.matmul %0, %2, %cst {dimension_numbers = #tpu.dot_dimension_numbers<[1], [0], [0], [1], [0, 0, 1, 1], [], []>} : vector<16x128xbf16>, vector<128x64xbf16>, vector<16x64xf32> -> vector<16x64xf32>
    %4 = arith.truncf %3 : vector<16x64xf32> to vector<16x64xbf16>
    %c0_4 = arith.constant 0 : index
    %c0_5 = arith.constant 0 : index
    %c0_6 = arith.constant 0 : index
    %5 = vector.load %arg4[%c0_4, %c0_5, %c0_6] : memref<1x16x64xbf16, #tpu.memory_space<vmem>>, vector<1x16x64xbf16>
    %6 = vector.shape_cast %5 : vector<1x16x64xbf16> to vector<16x64xbf16>
    %7 = vector.shape_cast %4 : vector<16x64xbf16> to vector<1x16x64xbf16>
    tpu.vector_store %arg4[%c0_4, %c0_5, %c0_6], %7 {strides = array<i32>} : memref<1x16x64xbf16, #tpu.memory_space<vmem>>, vector<1x16x64xbf16>,
    return
  }
  func.func @transform_0(%arg0: i32, %arg1: i32) -> (i32, i32, i32) {
    %c0_i32 = arith.constant 0 : i32
    %c0_i32_0 = arith.constant 0 : i32
    return %arg0, %c0_i32, %arg1 : i32, i32, i32
  }
  func.func @transform_1(%arg0: i32, %arg1: i32) -> (i32, i32) {
    %c0_i32 = arith.constant 0 : i32
    %c0_i32_0 = arith.constant 0 : i32
    %c0_i32_1 = arith.constant 0 : i32
    return %c0_i32, %c0_i32_0 : i32, i32
  }
  func.func @transform_2(%arg0: i32, %arg1: i32) -> (i32, i32, i32) {
    %c0_i32 = arith.constant 0 : i32
    %c0_i32_0 = arith.constant 0 : i32
    return %arg0, %c0_i32, %arg1 : i32, i32, i32
  }
}

</mosaic_0001>

<llo_original>
// kernel: tpu_custom_call.1
$region0: #{tpu_custom_call.1}
  #allocation0 [shape = 'u32[]', space=smem, size = 0x4, offset = 0x4, fixed_abs, tag = 'smem constant byte address 0x4 - core index']
  #allocation1 [shape = 'u32[144,128]{1,0:T(1,128)}', space=vmem, size = 0x12000, scoped, tag = 'internal scratch']
  %s0 = inlined_call_operand.vmem [shape: bf16[2,128,64], index: 0, kind: input, shape index: {}]
  %s1 = inlined_call_operand.vmem [shape: bf16[16,128], index: 1, kind: input, shape index: {}]
  %s2 = inlined_call_operand.hbm [shape: bf16[2,16,64], index: 2, kind: output, shape index: {}]
  %s3 = sld [smem:[#allocation0]]
  $region41: #{tpu_custom_call.1} parent=0
    _
  %s5 = ssub.s32 1, %s3
  %s6 = scalar_select 0, %s5, %s3
  $region1: #{tpu_custom_call.1} parent=0
    #allocation2 [shape = 'u8[8192]{0}', space=vmem, size = 0x2000, scoped, tag = 'output window, operand 0']
    #allocation3 [shape = 's32[2]{0}', space=sflag, size = 0x8, scoped, tag = 'scoped memory for tpu_custom_call.1']
    %7 = vsyncpa [#allocation3], 0
    %s8 = scalar_lea.sflag [#allocation3], 1
    %9 = vsyncpa %s8, 0
    loop: start=0, step=1, limit=4
    $region2: #{tpu_custom_call.1} parent=1 // loop_pre_header
      _
    $region3: #{tpu_custom_call.1} parent=1 // loop_header
      %s11 = sphi 0, %s15
      %p12 = scmp.ge.s32.totalorder %s11, 4
      %s18 = sphi 0, %s30
      %s19 = sphi 0, %s26
      %s20 = sphi 0, %s18
      %s21 = sphi 0, %s19
      %s22 = sphi 0, %s20
      %s23 = sphi 0, %s21
      %s35 = sphi 0, %s37
      %s38 = sphi 0, %s35
      %s39 = sphi 0, %s38
      %s55 = sphi 0, %s39
      %s59 = sphi 0, %s59
      %s61 = sphi 0, %s59
      %s62 = sphi 0, %s61
      %s76 = sphi 0, %s62
      %s84 = sphi 0, %s86
      %s87 = sphi 0, %s84
      %s88 = sphi 0, %s87
      %s104 = sphi 0, %s88
    $region4: #{tpu_custom_call.1} parent=1 // loop_header_branch
      %14 = sbr.rel (%p12) target = $region8
    $region5: #{tpu_custom_call.1} parent=1 // loop_body
      %s16 = ssub.s32 %s11, 1
      %s17 = ssub.s32 %s11, 2
      %s24 = sadd.s32 1, %s19
      %p25 = scmp.ge.s32.totalorder %s24, 1
      %s26 = scalar_select %p25, 0, %s24
      %s27 = sadd.s32 1, %s18
      %s28 = scalar_select %p25, %s27, %s18
      %p29 = scmp.ge.s32.totalorder %s28, 2
      %s30 = scalar_select %p29, 0, %s28
      %s31 = ssub.s32 %s18, %s30
      %s32 = ssub.s32 %s19, %s26
      %s33 = sor.u32 %s31, %s32
      %p34 = scmp.eq.s32.totalorder %s33, 0
      %s36 = sadd.s32 %s35, 1
      %s37 = scalar_select %p34, %s35, %s36
      %p40 = pneg %p34
      %p41 = scmp.eq.s32.totalorder %s11, 1
      %p42 = por %p40, %p41
      %p43 = scmp.ne.s32.totalorder %s35, %s38
      %p44 = scmp.eq.s32.totalorder %s11, 0
      %p45 = por %p43, %p44
      %p46 = scmp.ne.s32.totalorder %s35, %s38
      %p47 = scmp.eq.s32.totalorder %s16, 1
      %p48 = por %p46, %p47
      %p49 = scmp.ne.s32.totalorder %s38, %s39
      %p50 = scmp.eq.s32.totalorder %s16, 0
      %p51 = por %p49, %p50
      %p52 = scmp.ne.s32.totalorder %s38, %s39
      %p53 = scmp.eq.s32.totalorder %s17, 1
      %p54 = por %p52, %p53
      %p56 = scmp.ne.s32.totalorder %s39, %s55
      %p57 = scmp.eq.s32.totalorder %s17, 0
      %p58 = por %p56, %p57
      %s60 = sadd.s32 %s59, 1
      %p63 = scmp.eq.s32.totalorder %s11, 1
      %p64 = scmp.ne.s32.totalorder %s59, %s61
      %p65 = scmp.eq.s32.totalorder %s11, 0
      %p66 = por %p64, %p65
      %p67 = scmp.ne.s32.totalorder %s59, %s61
      %p68 = scmp.eq.s32.totalorder %s16, 1
      %p69 = por %p67, %p68
      %p70 = scmp.ne.s32.totalorder %s61, %s62
      %p71 = scmp.eq.s32.totalorder %s16, 0
      %p72 = por %p70, %p71
      %p73 = scmp.ne.s32.totalorder %s61, %s62
      %p74 = scmp.eq.s32.totalorder %s17, 1
      %p75 = por %p73, %p74
      %p77 = scmp.ne.s32.totalorder %s62, %s76
      %p78 = scmp.eq.s32.totalorder %s17, 0
      %p79 = por %p77, %p78
      %s80 = ssub.s32 %s18, %s30
      %s81 = ssub.s32 %s19, %s26
      %s82 = sor.u32 %s80, %s81
      %p83 = scmp.eq.s32.totalorder %s82, 0
      %s85 = sadd.s32 %s84, 1
      %s86 = scalar_select %p83, %s84, %s85
      %p89 = pneg %p83
      %p90 = scmp.eq.s32.totalorder %s11, 1
      %p91 = por %p89, %p90
      %p92 = scmp.ne.s32.totalorder %s84, %s87
      %p93 = scmp.eq.s32.totalorder %s11, 0
      %p94 = por %p92, %p93
      %p95 = scmp.ne.s32.totalorder %s84, %s87
      %p96 = scmp.eq.s32.totalorder %s16, 1
      %p97 = por %p95, %p96
      %p98 = scmp.ne.s32.totalorder %s87, %s88
      %p99 = scmp.eq.s32.totalorder %s16, 0
      %p100 = por %p98, %p99
      %p101 = scmp.ne.s32.totalorder %s87, %s88
      %p102 = scmp.eq.s32.totalorder %s17, 1
      %p103 = por %p101, %p102
      %p105 = scmp.ne.s32.totalorder %s88, %s104
      %p106 = scmp.eq.s32.totalorder %s17, 0
      %p107 = por %p105, %p106
      %p108 = scmp.le.s32.totalorder 1, %s11
      %p109 = scmp.lt.s32.totalorder %s11, 3
      %p110 = pnand %p108, %p109
      %p111 = pneg %p110
      // Predicated region
      $region9: #{tpu_custom_call.1} parent=5 // pred_check
        _
      $region10: #{tpu_custom_call.1} parent=5 // pred_check_branch
        %113 = sbr.rel (%p110) target = $region12
      $region11: #{tpu_custom_call.1} parent=5 // pred_region
        %s114 = ssub.s32 %s11, 1
        // Predicated region
        $region13: #{tpu_custom_call.1} parent=11 // pred_check
          %p115 = pneg %p72
        $region14: #{tpu_custom_call.1} parent=11 // pred_check_branch
          %117 = sbr.rel (%p115) target = $region16
        $region15: #{tpu_custom_call.1} parent=11 // pred_region
          _
        $region16: #{tpu_custom_call.1} parent=11 // pred_fallthru
          _
      $region12: #{tpu_custom_call.1} parent=5 // pred_fallthru
        _
      %p118 = scmp.lt.s32.totalorder %s11, 2
      // Predicated region
      $region17: #{tpu_custom_call.1} parent=5 // pred_check
        %p119 = pneg %p118
      $region18: #{tpu_custom_call.1} parent=5 // pred_check_branch
        %121 = sbr.rel (%p119) target = $region20
      $region19: #{tpu_custom_call.1} parent=5 // pred_region
        // Predicated region
        $region21: #{tpu_custom_call.1} parent=19 // pred_check
          %p122 = pneg %p45
        $region22: #{tpu_custom_call.1} parent=19 // pred_check_branch
          %124 = sbr.rel (%p122) target = $region24
        $region23: #{tpu_custom_call.1} parent=19 // pred_region
          %p125 = scmp.lt.s32.totalorder %s18, 1
          %s126 = scalar_select %p125, %s18, 1
          %p127 = scmp.lt.s32.totalorder %s19, 0
          %s128 = scalar_select %p127, %s19, 0
          %s129 = smul.addr %s126, 16
          %s130 = sadd.s32 %s128, %s129
          %s131 = smul.addr %s130, 4
          %s132 = scalar_lea.vmem %s0, %s131
        $region24: #{tpu_custom_call.1} parent=19 // pred_fallthru
          _
      $region20: #{tpu_custom_call.1} parent=5 // pred_fallthru
        _
      %p133 = scmp.le.s32.totalorder 1, %s11
      %p134 = scmp.lt.s32.totalorder %s11, 3
      %p135 = pnand %p133, %p134
      %p136 = pneg %p135
      // Predicated region
      $region25: #{tpu_custom_call.1} parent=5 // pred_check
        _
      $region26: #{tpu_custom_call.1} parent=5 // pred_check_branch
        %138 = sbr.rel (%p135) target = $region28
      $region27: #{tpu_custom_call.1} parent=5 // pred_region
        %s139 = ssub.s32 %s11, 1
        %p140 = scmp.lt.s32.totalorder %s20, 1
        %s141 = scalar_select %p140, %s20, 1
        %p142 = scmp.lt.s32.totalorder %s21, 0
        %s143 = scalar_select %p142, %s21, 0
        %s144 = smul.addr %s141, 16
        %s145 = sadd.s32 %s143, %s144
        %s146 = smul.addr %s145, 4
        %s147 = scalar_lea.vmem %s0, %s146
        %p148 = pneg %p51
        %p149 = pneg %p48
        %p150 = pneg %p72
        %p151 = pneg %p69
        %p152 = pneg %p100
        %p153 = pneg %p97
        %s154 = sand.u32 %s87, 1
        %s155 = scalar_lea.sflag [#allocation3], %s154
        %s156 = sand.u32 %s87, 1
        %s157 = smul.addr %s156, 8
        %s158 = scalar_lea.vmem [#allocation2], %s157
        %p159 = scmp.lt.s32.totalorder %s20, 1
        %s160 = scalar_select %p159, %s20, 1
        %p161 = scmp.lt.s32.totalorder %s21, 0
        %s162 = scalar_select %p161, %s21, 0
        %s163 = smul.addr %s160, 16
        %s164 = sadd.s32 %s162, %s163
        %s165 = smul.addr %s164, 4
        %s166 = scalar_lea.vmem %s0, %s165
        %v168 = vld [vmem:[%s1] sm:$0xf]
        %v169 = vld [vmem:[%s1 + $0x4] sm:$0xf]
        %v170 = vld [vmem:[%s166] sm:$0xf]
        %v171 = vld [vmem:[%s166 + $0x4] sm:$0xf]
        %v172 = vld [vmem:[%s166 + $0x8] sm:$0xf]
        %v173 = vld [vmem:[%s166 + $0xc] sm:$0xf]
        %v174 = vld [vmem:[%s166 + $0x10] sm:$0xf]
        %v175 = vld [vmem:[%s166 + $0x14] sm:$0xf]
        %v176 = vld [vmem:[%s166 + $0x18] sm:$0xf]
        %v177 = vld [vmem:[%s166 + $0x1c] sm:$0xf]
        %v178 = vld [vmem:[%s166 + $0x20] sm:$0xf]
        %v179 = vld [vmem:[%s166 + $0x24] sm:$0xf]
        %v180 = vld [vmem:[%s166 + $0x28] sm:$0xf]
        %v181 = vld [vmem:[%s166 + $0x2c] sm:$0xf]
        %v182 = vld [vmem:[%s166 + $0x30] sm:$0xf]
        %v183 = vld [vmem:[%s166 + $0x34] sm:$0xf]
        %v184 = vld [vmem:[%s166 + $0x38] sm:$0xf]
        %v185 = vld [vmem:[%s166 + $0x3c] sm:$0xf]
        %v188 = vunpack.c.l.b16 %v168
        %v189 = vunpack.c.l.b16 %v169
        %v190 = vpack.c.b16 %v189, %v188
        %v208 = vunpack.c.l.b16 %v170
        %v209 = vunpack.c.l.b16 %v171
        %v210 = vunpack.c.l.b16 %v172
        %v211 = vunpack.c.l.b16 %v173
        %v212 = vunpack.c.l.b16 %v174
        %v213 = vunpack.c.l.b16 %v175
        %v214 = vunpack.c.l.b16 %v176
        %v215 = vunpack.c.l.b16 %v177
        %v216 = vunpack.c.l.b16 %v178
        %v217 = vunpack.c.l.b16 %v179
        %v218 = vunpack.c.l.b16 %v180
        %v219 = vunpack.c.l.b16 %v181
        %v220 = vunpack.c.l.b16 %v182
        %v221 = vunpack.c.l.b16 %v183
        %v222 = vunpack.c.l.b16 %v184
        %v223 = vunpack.c.l.b16 %v185
        %v224 = vpack.c.b16 %v209, %v208
        %v225 = vpack.c.b16 %v211, %v210
        %v226 = vpack.c.b16 %v213, %v212
        %v227 = vpack.c.b16 %v215, %v214
        %v228 = vpack.c.b16 %v217, %v216
        %v229 = vpack.c.b16 %v219, %v218
        %v230 = vpack.c.b16 %v221, %v220
        %v231 = vpack.c.b16 %v223, %v222
        %240 = vmatprep.subr.bf16.mxu0 0
        %241 = vmatpush1.bf16.msra.mxu0 %v224
        %242 = vmatprep.subr.bf16.mxu0 0
        %243 = vmatpush1.bf16.msra.mxu0 %v225
        %244 = vmatprep.subr.bf16.mxu0 0
        %245 = vmatpush1.bf16.msra.mxu0 %v226
        %246 = vmatprep.subr.bf16.mxu0 0
        %247 = vmatpush1.bf16.msra.mxu0 %v227
        %248 = vmatprep.subr.bf16.mxu0 0
        %249 = vmatpush1.bf16.msra.mxu0 %v228
        %250 = vmatprep.subr.bf16.mxu0 0
        %251 = vmatpush1.bf16.msra.mxu0 %v229
        %252 = vmatprep.subr.bf16.mxu0 0
        %253 = vmatpush1.bf16.msra.mxu0 %v230
        %254 = vmatprep.subr.bf16.mxu0 0
        %255 = vmatpush1.bf16.msra.mxu0 %v231
        %256 = vmatprep.subr.bf16.mxu0 0
        %257 = vmatpush1.bf16.msra.mxu0 0
        %258 = vmatprep.subr.bf16.mxu0 0
        %259 = vmatpush1.bf16.msra.mxu0 0
        %260 = vmatprep.subr.bf16.mxu0 0
        %261 = vmatpush1.bf16.msra.mxu0 0
        %262 = vmatprep.subr.bf16.mxu0 0
        %263 = vmatpush1.bf16.msra.mxu0 0
        %264 = vmatprep.subr.bf16.mxu0 0
        %265 = vmatpush1.bf16.msra.mxu0 0
        %266 = vmatprep.subr.bf16.mxu0 0
        %267 = vmatpush1.bf16.msra.mxu0 0
        %268 = vmatprep.subr.bf16.mxu0 0
        %269 = vmatpush1.bf16.msra.mxu0 0
        %270 = vmatprep.subr.bf16.mxu0 0
        %271 = vmatpush1.bf16.msra.mxu0 0
        %272 = vmatprep.mubr.bf16.mxu0 0
        %273 = vmatmul.mubr.bf16.gmra.mrb[0].mxu0 %v190
        %v274 = vpop.f32.mrb[0].mxu0
        %v275 = vadd.f32 0.0, %v274
        %v276 = vpop.f32.mrb[0].mxu0
        %v277 = vpop.f32.mrb[0].mxu0
        %v278 = vadd.f32 0.0, %v277
        %v279 = vpop.f32.mrb[0].mxu0
        %280 = vdwg.mxu0
        %v281 = vpack.c.bf16 %v278, %v275
        %v283 = vunpack.c.l.b16 %v281
        %v284 = vunpack.c.h.b16 %v281
        %v285 = vpack.c.b16 %v283, %v283
        %v286 = vpack.c.b16 %v284, %v284
        %vm289 = vcmask 519168
        %290 = vst.msk [vmem:[%s158] sm:$0xf] %vm289, %v285
        %291 = vst.msk [vmem:[%s158 + $0x4] sm:$0xf] %vm289, %v286
        %s292 = sand.u32 %s87, 1
        %s293 = scalar_lea.sflag [#allocation3], %s292
        %s294 = sand.u32 %s87, 1
        %s295 = smul.addr %s294, 8
        %s296 = scalar_lea.vmem [#allocation2], %s295
        // Predicated region
        $region29: #{tpu_custom_call.1} parent=27 // pred_check
          %p297 = pneg %p97
        $region30: #{tpu_custom_call.1} parent=27 // pred_check_branch
          %299 = sbr.rel (%p297) target = $region32
        $region31: #{tpu_custom_call.1} parent=27 // pred_region
          %s301 = ssub.s32 128, 128
          %302 = vsyncadd %s293, %s301
          %s303 = smul.addr %s20, 2
          %s304 = sadd.s32 %s21, %s303
          %s305 = smul.addr %s304, 64
          %s306 = scalar_lea.hbm %s2, %s305
          %s307 = sshll.u32 %s296, 4
          %s308 = int_to_ptr.vmem [resolvable:$true] %s307
          %313 = dma.vmem_to_hbm [thread:$0]  %s308, 128, %s306, %s293, 64, 64, 4
        $region32: #{tpu_custom_call.1} parent=27 // pred_fallthru
          _
      $region28: #{tpu_custom_call.1} parent=5 // pred_fallthru
        _
      %p314 = scmp.le.s32.totalorder 2, %s11
      // Predicated region
      $region33: #{tpu_custom_call.1} parent=5 // pred_check
        %p315 = pneg %p314
      $region34: #{tpu_custom_call.1} parent=5 // pred_check_branch
        %317 = sbr.rel (%p315) target = $region36
      $region35: #{tpu_custom_call.1} parent=5 // pred_region
        %s318 = ssub.s32 %s11, 2
        // Predicated region
        $region37: #{tpu_custom_call.1} parent=35 // pred_check
          %p319 = pneg %p103
        $region38: #{tpu_custom_call.1} parent=35 // pred_check_branch
          %321 = sbr.rel (%p319) target = $region40
        $region39: #{tpu_custom_call.1} parent=35 // pred_region
          %s322 = sand.u32 %s88, 1
          %s323 = scalar_lea.sflag [#allocation3], %s322
          %s324 = sand.u32 %s88, 1
          %s325 = smul.addr %s324, 8
          %s326 = scalar_lea.vmem [#allocation2], %s325
          %327 = dma.done %s323, 128
        $region40: #{tpu_custom_call.1} parent=35 // pred_fallthru
          _
      $region36: #{tpu_custom_call.1} parent=5 // pred_fallthru
        _
    $region6: #{tpu_custom_call.1} parent=1 // loop_footer
      %s15 = sadd.s32 1, %s11
    $region7: #{tpu_custom_call.1} parent=1 // loop_footer_branch
      %10 = sbr.rel target = $region3
    $region8: #{tpu_custom_call.1} parent=1 // loop_exit
      _
    %328 = vsyncpa [#allocation3], 1
    %s329 = scalar_lea.sflag [#allocation3], 1
    %330 = vsyncpa %s329, 1

</llo_original>
